<compile_context>
chip_gen: v6e
topology: v6e:2x2x1
jax: 0.10.0
libtpu: 0.0.40
codegen_flags: <defaults>
</compile_context>

<pallas_src>
import jax
import jax.numpy as jnp
from jax.experimental import pallas as pl
from jax.experimental.pallas import tpu as pltpu


# ---------------------------------------------------------------------------
# Tile-size helper: largest multiple of `align` that divides n and is <=
# `preferred`; falls back to the full dimension (always legal for BlockSpec).
# ---------------------------------------------------------------------------
def _pick_tile(n, preferred, align):
    t = min(preferred, n)
    t = (t // align) * align
    while t >= align:
        if n % t == 0:
            return t
        t -= align
    return n


# ---------------------------------------------------------------------------
# Fused channel-mix kernel.
# Grid point (i, j):  i indexes a (TM, C) row tile of tokens, j indexes a
# (.., TF) slice of the hidden (dim_ffn) dimension.  The hidden dimension is
# the reduction axis: kv accumulates in an f32 VMEM scratch; the receptance
# gate and the final store happen once, on the last j.
# ---------------------------------------------------------------------------
def _cmix_kernel(x_ref, xx_ref, mk_ref, mr_ref, wk_ref, wv_ref, wr_ref,
                 o_ref, acc_ref):
    j = pl.program_id(1)

    @pl.when(j == 0)
    def _():
        acc_ref[...] = jnp.zeros_like(acc_ref)

    x = x_ref[...]                               # (TM, C)
    xx = xx_ref[...]                             # (TM, C)
    xk = x + xx * mk_ref[...]                    # data-dependent token mix

    # key projection slice -> relu^2 -> value projection slice (accumulate)
    kj = jnp.dot(xk, wk_ref[...], preferred_element_type=jnp.float32)  # (TM, TF)
    kj = jnp.maximum(kj, 0.0)
    kj = kj * kj
    acc_ref[...] += jnp.dot(kj, wv_ref[...], preferred_element_type=jnp.float32)

    @pl.when(j == pl.num_programs(1) - 1)
    def _():
        xr = x + xx * mr_ref[...]
        r = jax.nn.sigmoid(
            jnp.dot(xr, wr_ref[...], preferred_element_type=jnp.float32))
        o_ref[...] = (r * acc_ref[...]).astype(o_ref.dtype)


def rwkv_cmix_pallas(x2d, xx2d, maa_k, maa_r, wk_t, wv_t, wr_t,
                     *, tile_m=256, tile_f=512):
    """x2d, xx2d: (M, C);  maa_*: (1, C);  wk_t: (C, F);  wv_t: (F, C);
    wr_t: (C, C)  ->  (M, C)."""
    M, C = x2d.shape
    F = wk_t.shape[1]
    TM = _pick_tile(M, tile_m, 8)
    TF = _pick_tile(F, tile_f, 128)
    grid = (M // TM, F // TF)

    return pl.pallas_call(
        _cmix_kernel,
        out_shape=jax.ShapeDtypeStruct((M, C), x2d.dtype),
        grid_spec=pltpu.PrefetchScalarGridSpec(
            num_scalar_prefetch=0,
            grid=grid,
            in_specs=[
                pl.BlockSpec((TM, C), lambda i, j: (i, 0)),   # x rows
                pl.BlockSpec((TM, C), lambda i, j: (i, 0)),   # xx rows
                pl.BlockSpec((1, C), lambda i, j: (0, 0)),    # time_maa_k
                pl.BlockSpec((1, C), lambda i, j: (0, 0)),    # time_maa_r
                pl.BlockSpec((C, TF), lambda i, j: (0, j)),   # W_key^T slice
                pl.BlockSpec((TF, C), lambda i, j: (j, 0)),   # W_value^T slice
                pl.BlockSpec((C, C), lambda i, j: (0, 0)),    # W_receptance^T
            ],
            out_specs=pl.BlockSpec((TM, C), lambda i, j: (i, 0)),
            scratch_shapes=[pltpu.VMEM((TM, C), jnp.float32)],
        ),
        compiler_params=pltpu.CompilerParams(
            dimension_semantics=("parallel", "arbitrary")),
    )(x2d, xx2d, maa_k, maa_r, wk_t, wv_t, wr_t)


# ---------------------------------------------------------------------------
# Deterministic parameter construction (mirrors RWKV_CMix_x060.__init__).
# ---------------------------------------------------------------------------
def init_params(key, args, layer_id):
    C = args['n_embd']
    F = args['dim_ffn']
    n_layer = args['n_layer']
    ratio_1_to_almost0 = 1.0 - layer_id / n_layer

    ddd = (jnp.arange(C, dtype=jnp.float32) / C).reshape(1, 1, C)
    k1, k2, k3 = jax.random.split(key, 3)
    return dict(
        time_maa_k=1.0 - jnp.power(ddd, ratio_1_to_almost0),
        time_maa_r=1.0 - jnp.power(ddd, ratio_1_to_almost0),
        # nn.Linear weights (torch convention: (out_features, in_features))
        W_key=jax.random.normal(k1, (F, C), jnp.float32) * 0.05,
        W_receptance=jax.random.normal(k2, (C, C), jnp.float32) * 0.05,
        W_value=jax.random.normal(k3, (C, F), jnp.float32) * 0.05,
    )


# ---------------------------------------------------------------------------
# Forward pass.  Token shift (ZeroPad2d((0,0,1,-1))) is done once in JAX
# (cheap elementwise, XLA-fused); everything downstream runs in the fused
# Pallas kernel.  use_pallas=False gives a pure-JAX reference.
# ---------------------------------------------------------------------------
def forward(params, x, use_pallas=True):
    B, T, C = x.shape
    x_shift = jnp.pad(x, ((0, 0), (1, 0), (0, 0)))[:, :T, :]   # shift time by 1
    xx = x_shift - x

    if not use_pallas:
        xk = x + xx * params['time_maa_k']
        xr = x + xx * params['time_maa_r']
        k = xk @ params['W_key'].T
        k = jnp.maximum(k, 0.0) ** 2
        kv = k @ params['W_value'].T
        return jax.nn.sigmoid(xr @ params['W_receptance'].T) * kv

    x2d = x.reshape(B * T, C)
    xx2d = xx.reshape(B * T, C)
    out = rwkv_cmix_pallas(
        x2d, xx2d,
        params['time_maa_k'].reshape(1, C),
        params['time_maa_r'].reshape(1, C),
        params['W_key'].T,          # (C, F)
        params['W_value'].T,        # (F, C)
        params['W_receptance'].T,   # (C, C)
    )
    return out.reshape(B, T, C)


if __name__ == "__main__":
    args = dict(n_embd=32, dim_ffn=128, n_layer=4)
    layer_id = 1
    B, T, C = 2, 8, args['n_embd']

    key = jax.random.PRNGKey(0)
    k_params, k_x = jax.random.split(key)
    params = init_params(k_params, args, layer_id)
    x = jax.random.normal(k_x, (B, T, C), jnp.float32)

    out = jax.jit(lambda p, xi: forward(p, xi, use_pallas=True))(params, x)
    jax.block_until_ready(out)

    # Numerical sanity check against a pure-JAX reference.
    out_ref = jax.jit(lambda p, xi: forward(p, xi, use_pallas=False))(params, x)
    jax.block_until_ready(out_ref)
    assert out.shape == (B, T, C)
    assert jnp.allclose(out, out_ref, atol=1e-4, rtol=1e-4), "mismatch vs reference"

    print("KERNEL_OK")
</pallas_src>

<mosaic_0001>
module attributes {stable_mosaic.version = 11 : i64} {
  func.func @_cmix_kernel(%arg0: i32, %arg1: i32, %arg2: memref<16x32xf32, #tpu.memory_space<vmem>>, %arg3: memref<16x32xf32, #tpu.memory_space<vmem>>, %arg4: memref<1x32xf32, #tpu.memory_space<vmem>>, %arg5: memref<1x32xf32, #tpu.memory_space<vmem>>, %arg6: memref<32x128xf32, #tpu.memory_space<vmem>>, %arg7: memref<128x32xf32, #tpu.memory_space<vmem>>, %arg8: memref<32x32xf32, #tpu.memory_space<vmem>>, %arg9: memref<16x32xf32, #tpu.memory_space<vmem>>, %arg10: memref<16x32xf32, #tpu.memory_space<vmem>>) attributes {dimension_semantics = [#tpu.dimension_semantics<parallel>, #tpu.dimension_semantics<arbitrary>], iteration_bounds = array<i64: 1, 1>, scalar_prefetch = 0 : i64, scratch_operands = 1 : i64, tpu.core_type = #tpu.core_type<tc>, window_params = [{transform_indices = @transform_0, window_bounds = array<i64: 16, 32>}, {transform_indices = @transform_1, window_bounds = array<i64: 16, 32>}, {pipeline_mode = #tpu.pipeline_mode<synchronous>, transform_indices = @transform_2, window_bounds = array<i64: 1, 32>}, {pipeline_mode = #tpu.pipeline_mode<synchronous>, transform_indices = @transform_3, window_bounds = array<i64: 1, 32>}, {transform_indices = @transform_4, window_bounds = array<i64: 32, 128>}, {transform_indices = @transform_5, window_bounds = array<i64: 128, 32>}, {pipeline_mode = #tpu.pipeline_mode<synchronous>, transform_indices = @transform_6, window_bounds = array<i64: 32, 32>}, {transform_indices = @transform_7, window_bounds = array<i64: 16, 32>}]} {
    %c0_i32 = arith.constant 0 : i32
    %0 = arith.cmpi eq, %arg1, %c0_i32 : i32
    %1 = arith.extui %0 : i1 to i32
    %c0_i32_0 = arith.constant 0 : i32
    %2 = arith.cmpi ne, %1, %c0_i32_0 : i32
    scf.if %2 {
      %cst_18 = arith.constant 0.000000e+00 : f32
      %22 = vector.broadcast %cst_18 : f32 to vector<16x32xf32>
      %c0_19 = arith.constant 0 : index
      %c0_20 = arith.constant 0 : index
      %23 = vector.load %arg10[%c0_19, %c0_20] : memref<16x32xf32, #tpu.memory_space<vmem>>, vector<16x32xf32>
      tpu.vector_store %arg10[%c0_19, %c0_20], %22 {strides = array<i32>} : memref<16x32xf32, #tpu.memory_space<vmem>>, vector<16x32xf32>,
    } else {
    }
    %c0 = arith.constant 0 : index
    %c0_1 = arith.constant 0 : index
    %3 = vector.load %arg2[%c0, %c0_1] : memref<16x32xf32, #tpu.memory_space<vmem>>, vector<16x32xf32>
    %c0_2 = arith.constant 0 : index
    %c0_3 = arith.constant 0 : index
    %4 = vector.load %arg3[%c0_2, %c0_3] : memref<16x32xf32, #tpu.memory_space<vmem>>, vector<16x32xf32>
    %c0_4 = arith.constant 0 : index
    %c0_5 = arith.constant 0 : index
    %5 = vector.load %arg4[%c0_4, %c0_5] : memref<1x32xf32, #tpu.memory_space<vmem>>, vector<1x32xf32>
    %6 = vector.broadcast %5 : vector<1x32xf32> to vector<16x32xf32>
    %7 = arith.mulf %4, %6 : vector<16x32xf32>
    %8 = arith.addf %3, %7 : vector<16x32xf32>
    %c0_6 = arith.constant 0 : index
    %c0_7 = arith.constant 0 : index
    %9 = vector.load %arg6[%c0_6, %c0_7] : memref<32x128xf32, #tpu.memory_space<vmem>>, vector<32x128xf32>
    %cst = arith.constant dense<0.000000e+00> : vector<16x128xf32>
    %10 = tpu.matmul %8, %9, %cst {dimension_numbers = #tpu.dot_dimension_numbers<[1], [0], [0], [1], [0, 0, 1, 1], [], []>} : vector<16x32xf32>, vector<32x128xf32>, vector<16x128xf32> -> vector<16x128xf32>
    %cst_8 = arith.constant 0.000000e+00 : f32
    %11 = vector.broadcast %cst_8 : f32 to vector<16x128xf32>
    %12 = arith.maximumf %10, %11 : vector<16x128xf32>
    %13 = arith.mulf %12, %12 : vector<16x128xf32>
    %c0_9 = arith.constant 0 : index
    %c0_10 = arith.constant 0 : index
    %14 = vector.load %arg10[%c0_9, %c0_10] : memref<16x32xf32, #tpu.memory_space<vmem>>, vector<16x32xf32>
    %c0_11 = arith.constant 0 : index
    %c0_12 = arith.constant 0 : index
    %15 = vector.load %arg7[%c0_11, %c0_12] : memref<128x32xf32, #tpu.memory_space<vmem>>, vector<128x32xf32>
    %cst_13 = arith.constant dense<0.000000e+00> : vector<16x32xf32>
    %16 = tpu.matmul %13, %15, %cst_13 {dimension_numbers = #tpu.dot_dimension_numbers<[1], [0], [0], [1], [0, 0, 1, 1], [], []>} : vector<16x128xf32>, vector<128x32xf32>, vector<16x32xf32> -> vector<16x32xf32>
    %17 = arith.addf %14, %16 : vector<16x32xf32>
    %c0_14 = arith.constant 0 : index
    %c0_15 = arith.constant 0 : index
    %18 = vector.load %arg10[%c0_14, %c0_15] : memref<16x32xf32, #tpu.memory_space<vmem>>, vector<16x32xf32>
    tpu.vector_store %arg10[%c0_14, %c0_15], %17 {strides = array<i32>} : memref<16x32xf32, #tpu.memory_space<vmem>>, vector<16x32xf32>,
    %c0_i32_16 = arith.constant 0 : i32
    %19 = arith.cmpi eq, %arg1, %c0_i32_16 : i32
    %20 = arith.extui %19 : i1 to i32
    %c0_i32_17 = arith.constant 0 : i32
    %21 = arith.cmpi ne, %20, %c0_i32_17 : i32
    scf.if %21 {
      %c0_18 = arith.constant 0 : index
      %c0_19 = arith.constant 0 : index
      %22 = vector.load %arg5[%c0_18, %c0_19] : memref<1x32xf32, #tpu.memory_space<vmem>>, vector<1x32xf32>
      %23 = vector.broadcast %22 : vector<1x32xf32> to vector<16x32xf32>
      %24 = arith.mulf %4, %23 : vector<16x32xf32>
      %25 = arith.addf %3, %24 : vector<16x32xf32>
      %c0_20 = arith.constant 0 : index
      %c0_21 = arith.constant 0 : index
      %26 = vector.load %arg8[%c0_20, %c0_21] : memref<32x32xf32, #tpu.memory_space<vmem>>, vector<32x32xf32>
      %cst_22 = arith.constant dense<0.000000e+00> : vector<16x32xf32>
      %27 = tpu.matmul %25, %26, %cst_22 {dimension_numbers = #tpu.dot_dimension_numbers<[1], [0], [0], [1], [0, 0, 1, 1], [], []>} : vector<16x32xf32>, vector<32x32xf32>, vector<16x32xf32> -> vector<16x32xf32>
      %28 = arith.negf %27 : vector<16x32xf32>
      %29 = math.exp %28 : vector<16x32xf32>
      %cst_23 = arith.constant 1.000000e+00 : f32
      %30 = vector.broadcast %cst_23 : f32 to vector<16x32xf32>
      %31 = arith.addf %30, %29 : vector<16x32xf32>
      %32 = arith.divf %30, %31 : vector<16x32xf32>
      %c0_24 = arith.constant 0 : index
      %c0_25 = arith.constant 0 : index
      %33 = vector.load %arg10[%c0_24, %c0_25] : memref<16x32xf32, #tpu.memory_space<vmem>>, vector<16x32xf32>
      %34 = arith.mulf %32, %33 : vector<16x32xf32>
      %c0_26 = arith.constant 0 : index
      %c0_27 = arith.constant 0 : index
      %35 = vector.load %arg9[%c0_26, %c0_27] : memref<16x32xf32, #tpu.memory_space<vmem>>, vector<16x32xf32>
      tpu.vector_store %arg9[%c0_26, %c0_27], %34 {strides = array<i32>} : memref<16x32xf32, #tpu.memory_space<vmem>>, vector<16x32xf32>,
    } else {
    }
    return
  }
  func.func @transform_0(%arg0: i32, %arg1: i32) -> (i32, i32) {
    %c0_i32 = arith.constant 0 : i32
    %c0_i32_0 = arith.constant 0 : i32
    return %arg0, %c0_i32 : i32, i32
  }
  func.func @transform_1(%arg0: i32, %arg1: i32) -> (i32, i32) {
    %c0_i32 = arith.constant 0 : i32
    %c0_i32_0 = arith.constant 0 : i32
    return %arg0, %c0_i32 : i32, i32
  }
  func.func @transform_2(%arg0: i32, %arg1: i32) -> (i32, i32) {
    %c0_i32 = arith.constant 0 : i32
    %c0_i32_0 = arith.constant 0 : i32
    %c0_i32_1 = arith.constant 0 : i32
    return %c0_i32, %c0_i32_0 : i32, i32
  }
  func.func @transform_3(%arg0: i32, %arg1: i32) -> (i32, i32) {
    %c0_i32 = arith.constant 0 : i32
    %c0_i32_0 = arith.constant 0 : i32
    %c0_i32_1 = arith.constant 0 : i32
    return %c0_i32, %c0_i32_0 : i32, i32
  }
  func.func @transform_4(%arg0: i32, %arg1: i32) -> (i32, i32) {
    %c0_i32 = arith.constant 0 : i32
    %c0_i32_0 = arith.constant 0 : i32
    return %c0_i32, %arg1 : i32, i32
  }
  func.func @transform_5(%arg0: i32, %arg1: i32) -> (i32, i32) {
    %c0_i32 = arith.constant 0 : i32
    %c0_i32_0 = arith.constant 0 : i32
    return %arg1, %c0_i32 : i32, i32
  }
  func.func @transform_6(%arg0: i32, %arg1: i32) -> (i32, i32) {
    %c0_i32 = arith.constant 0 : i32
    %c0_i32_0 = arith.constant 0 : i32
    %c0_i32_1 = arith.constant 0 : i32
    return %c0_i32, %c0_i32_0 : i32, i32
  }
  func.func @transform_7(%arg0: i32, %arg1: i32) -> (i32, i32) {
    %c0_i32 = arith.constant 0 : i32
    %c0_i32_0 = arith.constant 0 : i32
    return %arg0, %c0_i32 : i32, i32
  }
}

</mosaic_0001>

<llo_original>
// kernel: _lambda_.1
$region0: #{_lambda_.1}
  #allocation0 [shape = 'u32[]', space=smem, size = 0x4, offset = 0x4, fixed_abs, tag = 'smem constant byte address 0x4 - core index']
  #allocation1 [shape = 'u32[144,128]{1,0:T(1,128)}', space=vmem, size = 0x12000, scoped, tag = 'internal scratch']
  #allocation2 [shape = 'f32[16,32]{1,0:T(8,128)}', space=vmem, size = 0x2000, scoped, tag = 'scratch operand']
  %s0 = inlined_call_operand.vmem [shape: f32[16,32], index: 0, kind: input, shape index: {}]
  %s1 = inlined_call_operand.vmem [shape: f32[16,32], index: 1, kind: input, shape index: {}]
  %s2 = inlined_call_operand.vmem [shape: f32[1,32], index: 2, kind: input, shape index: {}]
  %s3 = inlined_call_operand.vmem [shape: f32[1,32], index: 3, kind: input, shape index: {}]
  %s4 = inlined_call_operand.vmem [shape: f32[32,128], index: 4, kind: input, shape index: {}]
  %s5 = inlined_call_operand.vmem [shape: f32[128,32], index: 5, kind: input, shape index: {}]
  %s6 = inlined_call_operand.vmem [shape: f32[32,32], index: 6, kind: input, shape index: {}]
  %s7 = inlined_call_operand.hbm [shape: f32[16,32], index: 7, kind: output, shape index: {}]
  %s8 = sld [smem:[#allocation0]]
  $region46: #{_lambda_.1} parent=0
    _
  %s10 = ssub.s32 1, %s8
  %s11 = scalar_select 0, %s10, %s8
  $region1: #{_lambda_.1} parent=0
    #allocation3 [shape = 'u8[8192]{0}', space=vmem, size = 0x2000, scoped, tag = 'output window, operand 0, single buffered']
    #allocation4 [shape = 's32[1]{0}', space=sflag, size = 0x4, scoped, tag = 'scoped memory for _lambda_.1']
    %12 = vsyncpa [#allocation4], 0
    // Predicated region
    $region2: #{_lambda_.1} parent=1 // pred_check
      _
    $region3: #{_lambda_.1} parent=1 // pred_check_branch
      %14 = sbr.rel (0) target = $region5
    $region4: #{_lambda_.1} parent=1 // pred_region
      _
    $region5: #{_lambda_.1} parent=1 // pred_fallthru
      _
    // Predicated region
    $region6: #{_lambda_.1} parent=1 // pred_check
      _
    $region7: #{_lambda_.1} parent=1 // pred_check_branch
      %16 = sbr.rel (0) target = $region9
    $region8: #{_lambda_.1} parent=1 // pred_region
      _
    $region9: #{_lambda_.1} parent=1 // pred_fallthru
      _
    // Predicated region
    $region10: #{_lambda_.1} parent=1 // pred_check
      _
    $region11: #{_lambda_.1} parent=1 // pred_check_branch
      %18 = sbr.rel (0) target = $region13
    $region12: #{_lambda_.1} parent=1 // pred_region
      _
    $region13: #{_lambda_.1} parent=1 // pred_fallthru
      _
    // Predicated region
    $region14: #{_lambda_.1} parent=1 // pred_check
      _
    $region15: #{_lambda_.1} parent=1 // pred_check_branch
      %20 = sbr.rel (0) target = $region17
    $region16: #{_lambda_.1} parent=1 // pred_region
      _
    $region17: #{_lambda_.1} parent=1 // pred_fallthru
      _
    // Predicated region
    $region18: #{_lambda_.1} parent=1 // pred_check
      _
    $region19: #{_lambda_.1} parent=1 // pred_check_branch
      %22 = sbr.rel (0) target = $region21
    $region20: #{_lambda_.1} parent=1 // pred_region
      _
    $region21: #{_lambda_.1} parent=1 // pred_fallthru
      _
    // Predicated region
    $region22: #{_lambda_.1} parent=1 // pred_check
      _
    $region23: #{_lambda_.1} parent=1 // pred_check_branch
      %24 = sbr.rel (0) target = $region25
    $region24: #{_lambda_.1} parent=1 // pred_region
      _
    $region25: #{_lambda_.1} parent=1 // pred_fallthru
      _
    // Predicated region
    $region26: #{_lambda_.1} parent=1 // pred_check
      _
    $region27: #{_lambda_.1} parent=1 // pred_check_branch
      %26 = sbr.rel (0) target = $region29
    $region28: #{_lambda_.1} parent=1 // pred_region
      _
    $region29: #{_lambda_.1} parent=1 // pred_fallthru
      _
    %p27 = scmp.eq.s32.totalorder 0, 0
    // Predicated region
    $region30: #{_lambda_.1} parent=1 // pred_check
      %p28 = pneg %p27
    $region31: #{_lambda_.1} parent=1 // pred_check_branch
      %30 = sbr.rel (%p28) target = $region33
    $region32: #{_lambda_.1} parent=1 // pred_region
      %vm31 = vcmask 261120
      %32 = vst.msk [vmem:[#allocation2] sm:$0xff] %vm31, 0.0
      %33 = vst.msk [vmem:[#allocation2 + $0x8] sm:$0xff] %vm31, 0.0
    $region33: #{_lambda_.1} parent=1 // pred_fallthru
      _
    %v34 = vld [vmem:[%s0] sm:$0xff]
    %v35 = vld [vmem:[%s0 + $0x8] sm:$0xff]
    %v36 = vld [vmem:[%s1] sm:$0xff]
    %v37 = vld [vmem:[%s1 + $0x8] sm:$0xff]
    %v38 = vld [vmem:[%s2] sm:$0x1]
    %v40 = vlaneseq
    %v41 = vshrl.u32 %v40, 7
    %v42 = vsub.s32 0, %v41
    %v43 = vrot.slane %v38, %v42
    %v45 = vmul.f32 %v36, %v43
    %v46 = vmul.f32 %v37, %v43
    %v47 = vadd.f32 %v34, %v45
    %v48 = vadd.f32 %v35, %v46
    %v49 = vld [vmem:[%s4] sm:$0xff]
    %v50 = vld [vmem:[%s4 + $0x8] sm:$0xff]
    %v51 = vld [vmem:[%s4 + $0x10] sm:$0xff]
    %v52 = vld [vmem:[%s4 + $0x18] sm:$0xff]
    %vm53 = vcmask 261120
    %v55 = vsel %vm53, %v47, 0
    %v58 = vsel %vm53, %v48, 0
    %60 = vmatprep.subr.mxu0 0.0
    %61 = vmatpush1.msra.mxu0 0.0
    %62 = vmatprep.subr.mxu0 0.0
    %63 = vmatpush1.msra.mxu0 0.0
    %64 = vmatprep.subr.mxu0 0.0
    %65 = vmatpush1.msra.mxu0 0.0
    %66 = vmatprep.subr.mxu0 0.0
    %67 = vmatpush1.msra.mxu0 0.0
    %68 = vmatprep.subr.mxu0 0.0
    %69 = vmatpush1.msra.mxu0 0.0
    %70 = vmatprep.subr.mxu0 0.0
    %71 = vmatpush1.msra.mxu0 0.0
    %72 = vmatprep.subr.mxu0 0.0
    %73 = vmatpush1.msra.mxu0 0.0
    %74 = vmatprep.subr.mxu0 0.0
    %75 = vmatpush1.msra.mxu0 0.0
    %76 = vmatprep.subr.mxu0 0.0
    %77 = vmatpush1.msra.mxu0 0.0
    %78 = vmatprep.subr.mxu0 0.0
    %79 = vmatpush1.msra.mxu0 0.0
    %80 = vmatprep.subr.mxu0 0.0
    %81 = vmatpush1.msra.mxu0 0.0
    %82 = vmatprep.subr.mxu0 0.0
    %83 = vmatpush1.msra.mxu0 0.0
    %84 = vmatprep.subr.mxu0 0.0
    %85 = vmatpush1.msra.mxu0 %v52
    %86 = vmatprep.subr.mxu0 0.0
    %87 = vmatpush1.msra.mxu0 %v51
    %88 = vmatprep.subr.mxu0 0.0
    %89 = vmatpush1.msra.mxu0 %v50
    %90 = vmatprep.subr.mxu0 0.0
    %91 = vmatpush1.msra.mxu0 %v49
    %92 = vmatprep.subr.mxu0 0.0
    %93 = vmatpush2.msra.mxu0 0.0
    %94 = vmatprep.subr.mxu0 0.0
    %95 = vmatpush2.msra.mxu0 0.0
    %96 = vmatprep.subr.mxu0 0.0
    %97 = vmatpush2.msra.mxu0 0.0
    %98 = vmatprep.subr.mxu0 0.0
    %99 = vmatpush2.msra.mxu0 0.0
    %100 = vmatprep.subr.mxu0 0.0
    %101 = vmatpush2.msra.mxu0 0.0
    %102 = vmatprep.subr.mxu0 0.0
    %103 = vmatpush2.msra.mxu0 0.0
    %104 = vmatprep.subr.mxu0 0.0
    %105 = vmatpush2.msra.mxu0 0.0
    %106 = vmatprep.subr.mxu0 0.0
    %107 = vmatpush2.msra.mxu0 0.0
    %108 = vmatprep.subr.mxu0 0.0
    %109 = vmatpush2.msra.mxu0 0.0
    %110 = vmatprep.subr.mxu0 0.0
    %111 = vmatpush2.msra.mxu0 0.0
    %112 = vmatprep.subr.mxu0 0.0
    %113 = vmatpush2.msra.mxu0 0.0
    %114 = vmatprep.subr.mxu0 0.0
    %115 = vmatpush2.msra.mxu0 0.0
    %116 = vmatprep.subr.mxu0 0.0
    %117 = vmatpush2.msra.mxu0 0.0
    %118 = vmatprep.subr.mxu0 0.0
    %119 = vmatpush2.msra.mxu0 0.0
    %120 = vmatprep.subr.mxu0 0.0
    %121 = vmatpush2.msra.mxu0 0.0
    %122 = vmatprep.subr.mxu0 0.0
    %123 = vmatpush2.msra.mxu0 0.0
    %124 = vmatprep.mubr.f32.mxu0 0.0
    %125 = vmatmul.mubr.f32.gmra.mxu0 %v55
    %v126 = vpop.f32.mrf.mxu0
    %v127 = vadd.f32 0.0, %v126
    %v128 = vpop.f32.mrf.mxu0
    %129 = vmatprep.mubr.f32.mxu0 0.0
    %130 = vmatmul.mubr.f32.gmra.mxu0 %v58
    %v131 = vpop.f32.mrf.mxu0
    %v132 = vadd.f32 0.0, %v131
    %v133 = vpop.f32.mrf.mxu0
    %134 = vdwg.mxu0
    %v135 = vmax.f32 %v127, 0.0
    %v136 = vmax.f32 %v132, 0.0
    %v137 = vmul.f32 %v135, %v135
    %v138 = vmul.f32 %v136, %v136
    %v139 = vld [vmem:[#allocation2] sm:$0xff]
    %v140 = vld [vmem:[#allocation2 + $0x8] sm:$0xff]
    %v141 = vld [vmem:[%s5] sm:$0xff]
    %v142 = vld [vmem:[%s5 + $0x8] sm:$0xff]
    %v143 = vld [vmem:[%s5 + $0x10] sm:$0xff]
    %v144 = vld [vmem:[%s5 + $0x18] sm:$0xff]
    %v145 = vld [vmem:[%s5 + $0x20] sm:$0xff]
    %v146 = vld [vmem:[%s5 + $0x28] sm:$0xff]
    %v147 = vld [vmem:[%s5 + $0x30] sm:$0xff]
    %v148 = vld [vmem:[%s5 + $0x38] sm:$0xff]
    %v149 = vld [vmem:[%s5 + $0x40] sm:$0xff]
    %v150 = vld [vmem:[%s5 + $0x48] sm:$0xff]
    %v151 = vld [vmem:[%s5 + $0x50] sm:$0xff]
    %v152 = vld [vmem:[%s5 + $0x58] sm:$0xff]
    %v153 = vld [vmem:[%s5 + $0x60] sm:$0xff]
    %v154 = vld [vmem:[%s5 + $0x68] sm:$0xff]
    %v155 = vld [vmem:[%s5 + $0x70] sm:$0xff]
    %v156 = vld [vmem:[%s5 + $0x78] sm:$0xff]
    %157 = vmatprep.subr.mxu0 0.0
    %158 = vmatpush1.msra.mxu0 %v156
    %159 = vmatprep.subr.mxu0 0.0
    %160 = vmatpush1.msra.mxu0 %v155
    %161 = vmatprep.subr.mxu0 0.0
    %162 = vmatpush1.msra.mxu0 %v154
    %163 = vmatprep.subr.mxu0 0.0
    %164 = vmatpush1.msra.mxu0 %v153
    %165 = vmatprep.subr.mxu0 0.0
    %166 = vmatpush1.msra.mxu0 %v152
    %167 = vmatprep.subr.mxu0 0.0
    %168 = vmatpush1.msra.mxu0 %v151
    %169 = vmatprep.subr.mxu0 0.0
    %170 = vmatpush1.msra.mxu0 %v150
    %171 = vmatprep.subr.mxu0 0.0
    %172 = vmatpush1.msra.mxu0 %v149
    %173 = vmatprep.subr.mxu0 0.0
    %174 = vmatpush1.msra.mxu0 %v148
    %175 = vmatprep.subr.mxu0 0.0
    %176 = vmatpush1.msra.mxu0 %v147
    %177 = vmatprep.subr.mxu0 0.0
    %178 = vmatpush1.msra.mxu0 %v146
    %179 = vmatprep.subr.mxu0 0.0
    %180 = vmatpush1.msra.mxu0 %v145
    %181 = vmatprep.subr.mxu0 0.0
    %182 = vmatpush1.msra.mxu0 %v144
    %183 = vmatprep.subr.mxu0 0.0
    %184 = vmatpush1.msra.mxu0 %v143
    %185 = vmatprep.subr.mxu0 0.0
    %186 = vmatpush1.msra.mxu0 %v142
    %187 = vmatprep.subr.mxu0 0.0
    %188 = vmatpush1.msra.mxu0 %v141
    %189 = vmatprep.subr.mxu0 0.0
    %190 = vmatpush2.msra.mxu0 0.0
    %191 = vmatprep.subr.mxu0 0.0
    %192 = vmatpush2.msra.mxu0 0.0
    %193 = vmatprep.subr.mxu0 0.0
    %194 = vmatpush2.msra.mxu0 0.0
    %195 = vmatprep.subr.mxu0 0.0
    %196 = vmatpush2.msra.mxu0 0.0
    %197 = vmatprep.subr.mxu0 0.0
    %198 = vmatpush2.msra.mxu0 0.0
    %199 = vmatprep.subr.mxu0 0.0
    %200 = vmatpush2.msra.mxu0 0.0
    %201 = vmatprep.subr.mxu0 0.0
    %202 = vmatpush2.msra.mxu0 0.0
    %203 = vmatprep.subr.mxu0 0.0
    %204 = vmatpush2.msra.mxu0 0.0
    %205 = vmatprep.subr.mxu0 0.0
    %206 = vmatpush2.msra.mxu0 0.0
    %207 = vmatprep.subr.mxu0 0.0
    %208 = vmatpush2.msra.mxu0 0.0
    %209 = vmatprep.subr.mxu0 0.0
    %210 = vmatpush2.msra.mxu0 0.0
    %211 = vmatprep.subr.mxu0 0.0
    %212 = vmatpush2.msra.mxu0 0.0
    %213 = vmatprep.subr.mxu0 0.0
    %214 = vmatpush2.msra.mxu0 0.0
    %215 = vmatprep.subr.mxu0 0.0
    %216 = vmatpush2.msra.mxu0 0.0
    %217 = vmatprep.subr.mxu0 0.0
    %218 = vmatpush2.msra.mxu0 0.0
    %219 = vmatprep.subr.mxu0 0.0
    %220 = vmatpush2.msra.mxu0 0.0
    %221 = vmatprep.mubr.f32.mxu0 0.0
    %222 = vmatmul.mubr.f32.gmra.mxu0 %v137
    %v223 = vpop.f32.mrf.mxu0
    %v224 = vadd.f32 0.0, %v223
    %v225 = vpop.f32.mrf.mxu0
    %226 = vmatprep.mubr.f32.mxu0 0.0
    %227 = vmatmul.mubr.f32.gmra.mxu0 %v138
    %v228 = vpop.f32.mrf.mxu0
    %v229 = vadd.f32 0.0, %v228
    %v230 = vpop.f32.mrf.mxu0
    %231 = vdwg.mxu0
    %v232 = vadd.f32 %v139, %v224
    %v233 = vadd.f32 %v140, %v229
    %234 = vst.msk [vmem:[#allocation2] sm:$0xff] %vm53, %v232
    %235 = vst.msk [vmem:[#allocation2 + $0x8] sm:$0xff] %vm53, %v233
    // Predicated region
    $region34: #{_lambda_.1} parent=1 // pred_check
      %p236 = pneg %p27
    $region35: #{_lambda_.1} parent=1 // pred_check_branch
      %238 = sbr.rel (%p236) target = $region37
    $region36: #{_lambda_.1} parent=1 // pred_region
      %v239 = vld [vmem:[%s3] sm:$0x1]
      %v241 = vlaneseq
      %v242 = vshrl.u32 %v241, 7
      %v243 = vsub.s32 0, %v242
      %v244 = vrot.slane %v239, %v243
      %v246 = vmul.f32 %v36, %v244
      %v247 = vmul.f32 %v37, %v244
      %v248 = vadd.f32 %v34, %v246
      %v249 = vadd.f32 %v35, %v247
      %v250 = vld [vmem:[%s6] sm:$0xff]
      %v251 = vld [vmem:[%s6 + $0x8] sm:$0xff]
      %v252 = vld [vmem:[%s6 + $0x10] sm:$0xff]
      %v253 = vld [vmem:[%s6 + $0x18] sm:$0xff]
      %v255 = vsel %vm53, %v248, 0
      %v258 = vsel %vm53, %v249, 0
      %260 = vmatprep.subr.mxu0 0.0
      %261 = vmatpush1.msra.mxu0 0.0
      %262 = vmatprep.subr.mxu0 0.0
      %263 = vmatpush1.msra.mxu0 0.0
      %264 = vmatprep.subr.mxu0 0.0
      %265 = vmatpush1.msra.mxu0 0.0
      %266 = vmatprep.subr.mxu0 0.0
      %267 = vmatpush1.msra.mxu0 0.0
      %268 = vmatprep.subr.mxu0 0.0
      %269 = vmatpush1.msra.mxu0 0.0
      %270 = vmatprep.subr.mxu0 0.0
      %271 = vmatpush1.msra.mxu0 0.0
      %272 = vmatprep.subr.mxu0 0.0
      %273 = vmatpush1.msra.mxu0 0.0
      %274 = vmatprep.subr.mxu0 0.0
      %275 = vmatpush1.msra.mxu0 0.0
      %276 = vmatprep.subr.mxu0 0.0
      %277 = vmatpush1.msra.mxu0 0.0
      %278 = vmatprep.subr.mxu0 0.0
      %279 = vmatpush1.msra.mxu0 0.0
      %280 = vmatprep.subr.mxu0 0.0
      %281 = vmatpush1.msra.mxu0 0.0
      %282 = vmatprep.subr.mxu0 0.0
      %283 = vmatpush1.msra.mxu0 0.0
      %284 = vmatprep.subr.mxu0 0.0
      %285 = vmatpush1.msra.mxu0 %v253
      %286 = vmatprep.subr.mxu0 0.0
      %287 = vmatpush1.msra.mxu0 %v252
      %288 = vmatprep.subr.mxu0 0.0
      %289 = vmatpush1.msra.mxu0 %v251
      %290 = vmatprep.subr.mxu0 0.0
      %291 = vmatpush1.msra.mxu0 %v250
      %292 = vmatprep.subr.mxu0 0.0
      %293 = vmatpush2.msra.mxu0 0.0
      %294 = vmatprep.subr.mxu0 0.0
      %295 = vmatpush2.msra.mxu0 0.0
      %296 = vmatprep.subr.mxu0 0.0
      %297 = vmatpush2.msra.mxu0 0.0
      %298 = vmatprep.subr.mxu0 0.0
      %299 = vmatpush2.msra.mxu0 0.0
      %300 = vmatprep.subr.mxu0 0.0
      %301 = vmatpush2.msra.mxu0 0.0
      %302 = vmatprep.subr.mxu0 0.0
      %303 = vmatpush2.msra.mxu0 0.0
      %304 = vmatprep.subr.mxu0 0.0
      %305 = vmatpush2.msra.mxu0 0.0
      %306 = vmatprep.subr.mxu0 0.0
      %307 = vmatpush2.msra.mxu0 0.0
      %308 = vmatprep.subr.mxu0 0.0
      %309 = vmatpush2.msra.mxu0 0.0
      %310 = vmatprep.subr.mxu0 0.0
      %311 = vmatpush2.msra.mxu0 0.0
      %312 = vmatprep.subr.mxu0 0.0
      %313 = vmatpush2.msra.mxu0 0.0
      %314 = vmatprep.subr.mxu0 0.0
      %315 = vmatpush2.msra.mxu0 0.0
      %316 = vmatprep.subr.mxu0 0.0
      %317 = vmatpush2.msra.mxu0 0.0
      %318 = vmatprep.subr.mxu0 0.0
      %319 = vmatpush2.msra.mxu0 0.0
      %320 = vmatprep.subr.mxu0 0.0
      %321 = vmatpush2.msra.mxu0 0.0
      %322 = vmatprep.subr.mxu0 0.0
      %323 = vmatpush2.msra.mxu0 0.0
      %324 = vmatprep.mubr.f32.mxu0 0.0
      %325 = vmatmul.mubr.f32.gmra.mxu0 %v255
      %v326 = vpop.f32.mrf.mxu0
      %v327 = vadd.f32 0.0, %v326
      %v328 = vpop.f32.mrf.mxu0
      %329 = vmatprep.mubr.f32.mxu0 0.0
      %330 = vmatmul.mubr.f32.gmra.mxu0 %v258
      %v331 = vpop.f32.mrf.mxu0
      %v332 = vadd.f32 0.0, %v331
      %v333 = vpop.f32.mrf.mxu0
      %334 = vdwg.mxu0
      %v335 = vxor.u32 %v327, 2147483648
      %v336 = vxor.u32 %v332, 2147483648
      %v337 = vmul.f32 %v335, 1.442695
      %v338 = vpow.pop %v337
      %v339 = vmul.f32 %v336, 1.442695
      %v340 = vpow.pop %v339
      %v341 = vadd.f32 %v338, 1.0
      %v342 = vadd.f32 %v340, 1.0
      %v343 = vrcp.pop %v341
      %v344 = vmul.f32 1.0, %v343
      %v345 = vrcp.pop %v342
      %v346 = vmul.f32 1.0, %v345
      %v347 = vld [vmem:[#allocation2] sm:$0xff]
      %v348 = vld [vmem:[#allocation2 + $0x8] sm:$0xff]
      %v349 = vmul.f32 %v344, %v347
      %v350 = vmul.f32 %v346, %v348
      %351 = vst.msk [vmem:[#allocation3] sm:$0xff] %vm53, %v349
      %352 = vst.msk [vmem:[#allocation3 + $0x8] sm:$0xff] %vm53, %v350
    $region37: #{_lambda_.1} parent=1 // pred_fallthru
      _
    // Predicated region
    $region38: #{_lambda_.1} parent=1 // pred_check
      _
    $region39: #{_lambda_.1} parent=1 // pred_check_branch
      %354 = sbr.rel (0) target = $region41
    $region40: #{_lambda_.1} parent=1 // pred_region
      %s356 = ssub.s32 256, 256
      %357 = vsyncadd [#allocation4], %s356
      %s358 = sshll.u32 [#allocation3], 4
      %s359 = int_to_ptr.vmem [resolvable:$true] %s358
      %364 = dma.vmem_to_hbm [thread:$0]  %s359, 256, %s7, [#allocation4], 128, 128, 8
    $region41: #{_lambda_.1} parent=1 // pred_fallthru
      _
    // Predicated region
    $region42: #{_lambda_.1} parent=1 // pred_check
      _
    $region43: #{_lambda_.1} parent=1 // pred_check_branch
      %366 = sbr.rel (0) target = $region45
    $region44: #{_lambda_.1} parent=1 // pred_region
      %367 = dma.done [#allocation4], 256
    $region45: #{_lambda_.1} parent=1 // pred_fallthru
      _
    %368 = vsyncpa [#allocation4], 1

</llo_original>
